<compile_context>
chip_gen: v5e
topology: v5e:2x2
jax: 0.10.0
libtpu: 0.0.40
codegen_flags: <defaults>
</compile_context>

<pallas_src>
import jax
import jax.numpy as jnp
from jax import lax
from jax.experimental import pallas as pl
from jax.experimental.pallas import tpu as pltpu

BN_EPS = 1e-5
LANE = 128
SUBLANE = 8


def _round_up(x, m):
    return (x + m - 1) // m * m


# ---------------------------------------------------------------------------
# Fused kernel: one-hot MXU gather + max-pool + (fc->bn->relu->fc2) x heads
# ---------------------------------------------------------------------------
def _fused_kernel(ids_ref,   # (TB, S)        int32  VMEM
                  emb_ref,   # (V_pad, E_pad) f32    VMEM (resident, zero-padded)
                  w1_ref,    # (E_pad, H_pad) f32    VMEM (BN folded, heads concat)
                  b1_ref,    # (1, H_pad)     f32    VMEM
                  w2_ref,    # (H_pad, N_pad) f32    VMEM (block diagonal, padded)
                  b2_ref,    # (1, N_pad)     f32    VMEM
                  out_ref):  # (TB, N_pad)    f32    VMEM
    TB, S = ids_ref.shape
    V_pad = emb_ref.shape[0]

    emb = emb_ref[...]                                   # (V_pad, E_pad)
    ids = ids_ref[...]                                   # (TB, S) int32
    iota_v = lax.broadcasted_iota(jnp.int32, (TB, V_pad), 1)

    def embed(s):
        # One-hot row selection on the MXU: exact (0/1 weights, one hit/row).
        sel = (ids[:, s:s + 1] == iota_v).astype(jnp.float32)      # (TB, V_pad)
        return jnp.dot(sel, emb, preferred_element_type=jnp.float32)  # (TB, E_pad)

    # Running max over the sequence; S is a trace-time constant -> fully
    # unrolled, every max operates on a full (TB, E_pad) lane-dense tile.
    acc = embed(0)
    for s in range(1, S):
        acc = jnp.maximum(acc, embed(s))

    # Fused head epilogue (dropout = identity at eval, BN folded into W1/B1).
    h = jnp.dot(acc, w1_ref[...], preferred_element_type=jnp.float32) + b1_ref[...]
    h = jnp.maximum(h, 0.0)
    out_ref[...] = (jnp.dot(h, w2_ref[...], preferred_element_type=jnp.float32)
                    + b2_ref[...])


def fused_forward(token_ids, embedding, w1, b1, w2, b2, *, tb=None):
    """token_ids: (B, S) int32 -> (B, N_pad) f32 (heads concatenated, padded)."""
    B, S = token_ids.shape
    V_pad, E_pad = embedding.shape
    H_pad = w1.shape[1]
    N_pad = w2.shape[1]

    if tb is None:
        # Batch tile: >=8 rows so the pooled tile fills vreg sublanes; cap at
        # 128 (use ~128/256 for big B on v5e / v6e+v7x respectively).
        tb = min(128, _round_up(max(B, 1), SUBLANE))
    B_pad = _round_up(B, tb)
    if B_pad != B:
        token_ids = jnp.pad(token_ids, ((0, B_pad - B), (0, 0)))

    out = pl.pallas_call(
        _fused_kernel,
        out_shape=jax.ShapeDtypeStruct((B_pad, N_pad), jnp.float32),
        grid=(B_pad // tb,),
        in_specs=[
            pl.BlockSpec((tb, S), lambda i: (i, 0)),          # ids, per batch tile
            pl.BlockSpec((V_pad, E_pad), lambda i: (0, 0)),   # resident table
            pl.BlockSpec((E_pad, H_pad), lambda i: (0, 0)),   # resident weights
            pl.BlockSpec((1, H_pad), lambda i: (0, 0)),
            pl.BlockSpec((H_pad, N_pad), lambda i: (0, 0)),
            pl.BlockSpec((1, N_pad), lambda i: (0, 0)),
        ],
        out_specs=pl.BlockSpec((tb, N_pad), lambda i: (i, 0)),
        compiler_params=pltpu.CompilerParams(
            dimension_semantics=("parallel",),          # megacore over batch tiles
            vmem_limit_bytes=32 * 1024 * 1024,          # explicit, v7x(64MiB)-safe
        ),
    )(token_ids, embedding, w1, b1, w2, b2)
    return out[:B]


# ---------------------------------------------------------------------------
# Parameter construction (deterministic, mirrors _initialize_weights)
# ---------------------------------------------------------------------------
def xavier_normal(key, shape):
    # nn.Linear weight shape is (fan_out, fan_in)
    fan_out, fan_in = shape
    std = (2.0 / (fan_in + fan_out)) ** 0.5
    return std * jax.random.normal(key, shape, dtype=jnp.float32)


def make_params(key, vocab_size, embedding_dim, label_sizes):
    keys = jax.random.split(key, 1 + 2 * len(label_sizes))
    params = {}
    # Embedding table ("pretrained vectors" -> random here, frozen).
    params["embedding"] = jax.random.normal(
        keys[0], (vocab_size, embedding_dim), dtype=jnp.float32)
    params["heads"] = []
    for i, n_out in enumerate(label_sizes):
        w1 = xavier_normal(keys[1 + 2 * i], (embedding_dim, embedding_dim))
        b1 = jnp.zeros((1, embedding_dim), jnp.float32)
        w2 = xavier_normal(keys[2 + 2 * i], (n_out, embedding_dim))
        b2 = jnp.zeros((1, n_out), jnp.float32)
        # BatchNorm1d init: weight=1, bias=0, running_mean=0, running_var=1.
        gamma = jnp.ones((1, embedding_dim), jnp.float32)
        beta = jnp.zeros((1, embedding_dim), jnp.float32)
        mean = jnp.zeros((1, embedding_dim), jnp.float32)
        var = jnp.ones((1, embedding_dim), jnp.float32)
        params["heads"].append((w1, b1, gamma, beta, mean, var, w2, b2))
    return params


def fold_fused_params(params):
    """Fold eval-mode BN into fc1, pre-transpose, concat heads, pad everything
    (vocab, E, hidden concat, output N) to lane-dense multiples of 128."""
    heads = params["heads"]
    V, E = params["embedding"].shape
    V_pad = _round_up(V, LANE)
    E_pad = _round_up(E, LANE)
    n_heads = len(heads)
    H_pad = n_heads * E_pad
    sizes = [h[6].shape[0] for h in heads]          # fc2 output sizes
    N_pad = _round_up(sum(sizes), LANE)

    emb = jnp.zeros((V_pad, E_pad), jnp.float32).at[:V, :E].set(params["embedding"])

    W1 = jnp.zeros((E_pad, H_pad), jnp.float32)
    B1 = jnp.zeros((1, H_pad), jnp.float32)
    W2 = jnp.zeros((H_pad, N_pad), jnp.float32)
    B2 = jnp.zeros((1, N_pad), jnp.float32)
    slices = []
    off = 0
    for i, (w1, b1, gamma, beta, mean, var, w2, b2) in enumerate(heads):
        scale = gamma / jnp.sqrt(var + BN_EPS)                           # (1, E)
        W1 = W1.at[:E, i * E_pad:i * E_pad + E].set(w1.T * scale)        # BN folded
        B1 = B1.at[:, i * E_pad:i * E_pad + E].set(b1 * scale + beta - mean * scale)
        n_i = w2.shape[0]
        W2 = W2.at[i * E_pad:i * E_pad + E, off:off + n_i].set(w2.T)     # block diag
        B2 = B2.at[:, off:off + n_i].set(b2)
        slices.append((off, n_i))
        off += n_i

    fused = {"embedding": emb, "W1": W1, "B1": B1, "W2": W2, "B2": B2}
    return fused, tuple(slices)


# ---------------------------------------------------------------------------
# Forward pass
# ---------------------------------------------------------------------------
@jax.jit
def _forward_fused(fparams, token_ids):
    return fused_forward(token_ids, fparams["embedding"], fparams["W1"],
                         fparams["B1"], fparams["W2"], fparams["B2"])


def forward(fparams, head_slices, token_ids):
    out = _forward_fused(fparams, token_ids)                        # (B, N_pad)
    return tuple(out[:, o:o + n] for (o, n) in head_slices)


# ---------------------------------------------------------------------------
# Reference in plain JAX (unfused, for sanity check)
# ---------------------------------------------------------------------------
def forward_ref(params, token_ids):
    embedded = jnp.take(params["embedding"], token_ids, axis=0)
    pooled = jnp.max(embedded, axis=1)
    outs = []
    for (w1, b1, gamma, beta, mean, var, w2, b2) in params["heads"]:
        h = pooled @ w1.T + b1
        h = (h - mean) / jnp.sqrt(var + BN_EPS) * gamma + beta
        h = jnp.maximum(h, 0.0)
        outs.append(h @ w2.T + b2)
    return tuple(outs)


if __name__ == "__main__":
    key = jax.random.PRNGKey(0)
    k_params, k_ids = jax.random.split(key)

    vocab_size = 100
    embedding_dim = 32
    label_sizes = [5, 7, 3]   # len(LABEL[i].vocab) for the 3 heads
    batch, seq = 2, 8

    params = make_params(k_params, vocab_size, embedding_dim, label_sizes)
    fused_params, head_slices = fold_fused_params(params)
    token_ids = jax.random.randint(k_ids, (batch, seq), 0, vocab_size,
                                   dtype=jnp.int32)

    outs = forward(fused_params, head_slices, token_ids)
    outs = jax.block_until_ready(outs)

    refs = forward_ref(params, token_ids)
    for o, r, n in zip(outs, refs, label_sizes):
        assert o.shape == (batch, n), o.shape
        assert jnp.allclose(o, r, atol=1e-4, rtol=1e-4), "mismatch vs reference"

    print("KERNEL_OK")
</pallas_src>

<mosaic_0001>
module attributes {stable_mosaic.version = 11 : i64} {
  func.func @_fused_kernel(%arg0: i32, %arg1: memref<8x8xi32, #tpu.memory_space<vmem>>, %arg2: memref<128x128xf32, #tpu.memory_space<vmem>>, %arg3: memref<128x384xf32, #tpu.memory_space<vmem>>, %arg4: memref<1x384xf32, #tpu.memory_space<vmem>>, %arg5: memref<384x128xf32, #tpu.memory_space<vmem>>, %arg6: memref<1x128xf32, #tpu.memory_space<vmem>>, %arg7: memref<8x128xf32, #tpu.memory_space<vmem>>) attributes {dimension_semantics = [#tpu.dimension_semantics<parallel>], iteration_bounds = array<i64: 1>, scalar_prefetch = 0 : i64, scratch_operands = 0 : i64, tpu.core_type = #tpu.core_type<tc>, window_params = [{transform_indices = @transform_0, window_bounds = array<i64: 8, 8>}, {pipeline_mode = #tpu.pipeline_mode<synchronous>, transform_indices = @transform_1, window_bounds = array<i64: 128, 128>}, {pipeline_mode = #tpu.pipeline_mode<synchronous>, transform_indices = @transform_2, window_bounds = array<i64: 128, 384>}, {pipeline_mode = #tpu.pipeline_mode<synchronous>, transform_indices = @transform_3, window_bounds = array<i64: 1, 384>}, {pipeline_mode = #tpu.pipeline_mode<synchronous>, transform_indices = @transform_4, window_bounds = array<i64: 384, 128>}, {pipeline_mode = #tpu.pipeline_mode<synchronous>, transform_indices = @transform_5, window_bounds = array<i64: 1, 128>}, {transform_indices = @transform_6, window_bounds = array<i64: 8, 128>}]} {
    %c0 = arith.constant 0 : index
    %c0_0 = arith.constant 0 : index
    %0 = vector.load %arg2[%c0, %c0_0] : memref<128x128xf32, #tpu.memory_space<vmem>>, vector<128x128xf32>
    %c0_1 = arith.constant 0 : index
    %c0_2 = arith.constant 0 : index
    %1 = vector.load %arg1[%c0_1, %c0_2] : memref<8x8xi32, #tpu.memory_space<vmem>>, vector<8x8xi32>
    %2 = tpu.iota {dimensions = array<i32: 1>} : vector<8x128xi32>
    %3 = vector.extract_strided_slice %1 {offsets = [0, 0], sizes = [8, 1], strides = [1, 1]} : vector<8x8xi32> to vector<8x1xi32>
    %4 = vector.broadcast %3 : vector<8x1xi32> to vector<8x128xi32>
    %5 = arith.cmpi eq, %4, %2 : vector<8x128xi32>
    %6 = arith.extui %5 : vector<8x128xi1> to vector<8x128xi32>
    %7 = arith.sitofp %6 : vector<8x128xi32> to vector<8x128xf32>
    %cst = arith.constant dense<0.000000e+00> : vector<8x128xf32>
    %8 = tpu.matmul %7, %0, %cst {dimension_numbers = #tpu.dot_dimension_numbers<[1], [0], [0], [1], [0, 0, 1, 1], [], []>} : vector<8x128xf32>, vector<128x128xf32>, vector<8x128xf32> -> vector<8x128xf32>
    %9 = vector.extract_strided_slice %1 {offsets = [0, 1], sizes = [8, 1], strides = [1, 1]} : vector<8x8xi32> to vector<8x1xi32>
    %10 = vector.broadcast %9 : vector<8x1xi32> to vector<8x128xi32>
    %11 = arith.cmpi eq, %10, %2 : vector<8x128xi32>
    %12 = arith.extui %11 : vector<8x128xi1> to vector<8x128xi32>
    %13 = arith.sitofp %12 : vector<8x128xi32> to vector<8x128xf32>
    %cst_3 = arith.constant dense<0.000000e+00> : vector<8x128xf32>
    %14 = tpu.matmul %13, %0, %cst_3 {dimension_numbers = #tpu.dot_dimension_numbers<[1], [0], [0], [1], [0, 0, 1, 1], [], []>} : vector<8x128xf32>, vector<128x128xf32>, vector<8x128xf32> -> vector<8x128xf32>
    %15 = arith.maximumf %8, %14 : vector<8x128xf32>
    %16 = vector.extract_strided_slice %1 {offsets = [0, 2], sizes = [8, 1], strides = [1, 1]} : vector<8x8xi32> to vector<8x1xi32>
    %17 = vector.broadcast %16 : vector<8x1xi32> to vector<8x128xi32>
    %18 = arith.cmpi eq, %17, %2 : vector<8x128xi32>
    %19 = arith.extui %18 : vector<8x128xi1> to vector<8x128xi32>
    %20 = arith.sitofp %19 : vector<8x128xi32> to vector<8x128xf32>
    %cst_4 = arith.constant dense<0.000000e+00> : vector<8x128xf32>
    %21 = tpu.matmul %20, %0, %cst_4 {dimension_numbers = #tpu.dot_dimension_numbers<[1], [0], [0], [1], [0, 0, 1, 1], [], []>} : vector<8x128xf32>, vector<128x128xf32>, vector<8x128xf32> -> vector<8x128xf32>
    %22 = arith.maximumf %15, %21 : vector<8x128xf32>
    %23 = vector.extract_strided_slice %1 {offsets = [0, 3], sizes = [8, 1], strides = [1, 1]} : vector<8x8xi32> to vector<8x1xi32>
    %24 = vector.broadcast %23 : vector<8x1xi32> to vector<8x128xi32>
    %25 = arith.cmpi eq, %24, %2 : vector<8x128xi32>
    %26 = arith.extui %25 : vector<8x128xi1> to vector<8x128xi32>
    %27 = arith.sitofp %26 : vector<8x128xi32> to vector<8x128xf32>
    %cst_5 = arith.constant dense<0.000000e+00> : vector<8x128xf32>
    %28 = tpu.matmul %27, %0, %cst_5 {dimension_numbers = #tpu.dot_dimension_numbers<[1], [0], [0], [1], [0, 0, 1, 1], [], []>} : vector<8x128xf32>, vector<128x128xf32>, vector<8x128xf32> -> vector<8x128xf32>
    %29 = arith.maximumf %22, %28 : vector<8x128xf32>
    %30 = vector.extract_strided_slice %1 {offsets = [0, 4], sizes = [8, 1], strides = [1, 1]} : vector<8x8xi32> to vector<8x1xi32>
    %31 = vector.broadcast %30 : vector<8x1xi32> to vector<8x128xi32>
    %32 = arith.cmpi eq, %31, %2 : vector<8x128xi32>
    %33 = arith.extui %32 : vector<8x128xi1> to vector<8x128xi32>
    %34 = arith.sitofp %33 : vector<8x128xi32> to vector<8x128xf32>
    %cst_6 = arith.constant dense<0.000000e+00> : vector<8x128xf32>
    %35 = tpu.matmul %34, %0, %cst_6 {dimension_numbers = #tpu.dot_dimension_numbers<[1], [0], [0], [1], [0, 0, 1, 1], [], []>} : vector<8x128xf32>, vector<128x128xf32>, vector<8x128xf32> -> vector<8x128xf32>
    %36 = arith.maximumf %29, %35 : vector<8x128xf32>
    %37 = vector.extract_strided_slice %1 {offsets = [0, 5], sizes = [8, 1], strides = [1, 1]} : vector<8x8xi32> to vector<8x1xi32>
    %38 = vector.broadcast %37 : vector<8x1xi32> to vector<8x128xi32>
    %39 = arith.cmpi eq, %38, %2 : vector<8x128xi32>
    %40 = arith.extui %39 : vector<8x128xi1> to vector<8x128xi32>
    %41 = arith.sitofp %40 : vector<8x128xi32> to vector<8x128xf32>
    %cst_7 = arith.constant dense<0.000000e+00> : vector<8x128xf32>
    %42 = tpu.matmul %41, %0, %cst_7 {dimension_numbers = #tpu.dot_dimension_numbers<[1], [0], [0], [1], [0, 0, 1, 1], [], []>} : vector<8x128xf32>, vector<128x128xf32>, vector<8x128xf32> -> vector<8x128xf32>
    %43 = arith.maximumf %36, %42 : vector<8x128xf32>
    %44 = vector.extract_strided_slice %1 {offsets = [0, 6], sizes = [8, 1], strides = [1, 1]} : vector<8x8xi32> to vector<8x1xi32>
    %45 = vector.broadcast %44 : vector<8x1xi32> to vector<8x128xi32>
    %46 = arith.cmpi eq, %45, %2 : vector<8x128xi32>
    %47 = arith.extui %46 : vector<8x128xi1> to vector<8x128xi32>
    %48 = arith.sitofp %47 : vector<8x128xi32> to vector<8x128xf32>
    %cst_8 = arith.constant dense<0.000000e+00> : vector<8x128xf32>
    %49 = tpu.matmul %48, %0, %cst_8 {dimension_numbers = #tpu.dot_dimension_numbers<[1], [0], [0], [1], [0, 0, 1, 1], [], []>} : vector<8x128xf32>, vector<128x128xf32>, vector<8x128xf32> -> vector<8x128xf32>
    %50 = arith.maximumf %43, %49 : vector<8x128xf32>
    %51 = vector.extract_strided_slice %1 {offsets = [0, 7], sizes = [8, 1], strides = [1, 1]} : vector<8x8xi32> to vector<8x1xi32>
    %52 = vector.broadcast %51 : vector<8x1xi32> to vector<8x128xi32>
    %53 = arith.cmpi eq, %52, %2 : vector<8x128xi32>
    %54 = arith.extui %53 : vector<8x128xi1> to vector<8x128xi32>
    %55 = arith.sitofp %54 : vector<8x128xi32> to vector<8x128xf32>
    %cst_9 = arith.constant dense<0.000000e+00> : vector<8x128xf32>
    %56 = tpu.matmul %55, %0, %cst_9 {dimension_numbers = #tpu.dot_dimension_numbers<[1], [0], [0], [1], [0, 0, 1, 1], [], []>} : vector<8x128xf32>, vector<128x128xf32>, vector<8x128xf32> -> vector<8x128xf32>
    %57 = arith.maximumf %50, %56 : vector<8x128xf32>
    %c0_10 = arith.constant 0 : index
    %c0_11 = arith.constant 0 : index
    %58 = vector.load %arg3[%c0_10, %c0_11] : memref<128x384xf32, #tpu.memory_space<vmem>>, vector<128x384xf32>
    %cst_12 = arith.constant dense<0.000000e+00> : vector<8x384xf32>
    %59 = tpu.matmul %57, %58, %cst_12 {dimension_numbers = #tpu.dot_dimension_numbers<[1], [0], [0], [1], [0, 0, 1, 1], [], []>} : vector<8x128xf32>, vector<128x384xf32>, vector<8x384xf32> -> vector<8x384xf32>
    %c0_13 = arith.constant 0 : index
    %c0_14 = arith.constant 0 : index
    %60 = vector.load %arg4[%c0_13, %c0_14] : memref<1x384xf32, #tpu.memory_space<vmem>>, vector<1x384xf32>
    %61 = vector.broadcast %60 : vector<1x384xf32> to vector<8x384xf32>
    %62 = arith.addf %59, %61 : vector<8x384xf32>
    %cst_15 = arith.constant 0.000000e+00 : f32
    %63 = vector.broadcast %cst_15 : f32 to vector<8x384xf32>
    %64 = arith.maximumf %62, %63 : vector<8x384xf32>
    %c0_16 = arith.constant 0 : index
    %c0_17 = arith.constant 0 : index
    %65 = vector.load %arg5[%c0_16, %c0_17] : memref<384x128xf32, #tpu.memory_space<vmem>>, vector<384x128xf32>
    %cst_18 = arith.constant dense<0.000000e+00> : vector<8x128xf32>
    %66 = tpu.matmul %64, %65, %cst_18 {dimension_numbers = #tpu.dot_dimension_numbers<[1], [0], [0], [1], [0, 0, 1, 1], [], []>} : vector<8x384xf32>, vector<384x128xf32>, vector<8x128xf32> -> vector<8x128xf32>
    %c0_19 = arith.constant 0 : index
    %c0_20 = arith.constant 0 : index
    %67 = vector.load %arg6[%c0_19, %c0_20] : memref<1x128xf32, #tpu.memory_space<vmem>>, vector<1x128xf32>
    %68 = vector.broadcast %67 : vector<1x128xf32> to vector<8x128xf32>
    %69 = arith.addf %66, %68 : vector<8x128xf32>
    %c0_21 = arith.constant 0 : index
    %c0_22 = arith.constant 0 : index
    %70 = vector.load %arg7[%c0_21, %c0_22] : memref<8x128xf32, #tpu.memory_space<vmem>>, vector<8x128xf32>
    tpu.vector_store %arg7[%c0_21, %c0_22], %69 {strides = array<i32>} : memref<8x128xf32, #tpu.memory_space<vmem>>, vector<8x128xf32>,
    return
  }
  func.func @transform_0(%arg0: i32) -> (i32, i32) {
    %c0_i32 = arith.constant 0 : i32
    %c0_i32_0 = arith.constant 0 : i32
    return %arg0, %c0_i32 : i32, i32
  }
  func.func @transform_1(%arg0: i32) -> (i32, i32) {
    %c0_i32 = arith.constant 0 : i32
    %c0_i32_0 = arith.constant 0 : i32
    %c0_i32_1 = arith.constant 0 : i32
    return %c0_i32, %c0_i32_0 : i32, i32
  }
  func.func @transform_2(%arg0: i32) -> (i32, i32) {
    %c0_i32 = arith.constant 0 : i32
    %c0_i32_0 = arith.constant 0 : i32
    %c0_i32_1 = arith.constant 0 : i32
    return %c0_i32, %c0_i32_0 : i32, i32
  }
  func.func @transform_3(%arg0: i32) -> (i32, i32) {
    %c0_i32 = arith.constant 0 : i32
    %c0_i32_0 = arith.constant 0 : i32
    %c0_i32_1 = arith.constant 0 : i32
    return %c0_i32, %c0_i32_0 : i32, i32
  }
  func.func @transform_4(%arg0: i32) -> (i32, i32) {
    %c0_i32 = arith.constant 0 : i32
    %c0_i32_0 = arith.constant 0 : i32
    %c0_i32_1 = arith.constant 0 : i32
    return %c0_i32, %c0_i32_0 : i32, i32
  }
  func.func @transform_5(%arg0: i32) -> (i32, i32) {
    %c0_i32 = arith.constant 0 : i32
    %c0_i32_0 = arith.constant 0 : i32
    %c0_i32_1 = arith.constant 0 : i32
    return %c0_i32, %c0_i32_0 : i32, i32
  }
  func.func @transform_6(%arg0: i32) -> (i32, i32) {
    %c0_i32 = arith.constant 0 : i32
    %c0_i32_0 = arith.constant 0 : i32
    return %arg0, %c0_i32 : i32, i32
  }
}

</mosaic_0001>

<llo_original>
// kernel: _forward_fused.1
$region0: #{_forward_fused.1}
  #allocation0 [shape = 'u32[]', space=smem, size = 0x4, offset = 0x4, fixed_abs, tag = 'smem constant byte address 0x4 - core index']
  #allocation1 [shape = 'u32[72,128]{1,0:T(1,128)}', space=vmem, size = 0x9000, scoped, tag = 'internal scratch']
  %s0 = inlined_call_operand.vmem [shape: s32[8,8], index: 0, kind: input, shape index: {}]
  %s1 = inlined_call_operand.hbm [shape: f32[128,128], index: 1, kind: input, shape index: {}]
  %s2 = inlined_call_operand.hbm [shape: f32[128,384], index: 2, kind: input, shape index: {}]
  %s3 = inlined_call_operand.vmem [shape: f32[1,384], index: 3, kind: input, shape index: {}]
  %s4 = inlined_call_operand.hbm [shape: f32[384,128], index: 4, kind: input, shape index: {}]
  %s5 = inlined_call_operand.vmem [shape: f32[1,128], index: 5, kind: input, shape index: {}]
  %s6 = inlined_call_operand.vmem [shape: f32[8,128], index: 6, kind: output, shape index: {}]
  %s7 = sld [smem:[#allocation0]]
  $region46: #{_forward_fused.1} parent=0
    _
  %s9 = ssub.s32 1, %s7
  %s10 = scalar_select 0, %s9, %s7
  $region1: #{_forward_fused.1} parent=0
    #allocation2 [shape = 'u8[65536]{0}', space=vmem, size = 0x10000, scoped, tag = 'input window, operand 1, single buffered']
    #allocation3 [shape = 's32[1]{0}', space=sflag, size = 0x4, scoped, tag = 'scoped memory for _forward_fused.1']
    #allocation4 [shape = 'u8[196608]{0}', space=vmem, size = 0x30000, scoped, tag = 'input window, operand 2, single buffered']
    #allocation5 [shape = 's32[1]{0}', space=sflag, size = 0x4, scoped, tag = 'scoped memory for _forward_fused.1']
    #allocation6 [shape = 'u8[196608]{0}', space=vmem, size = 0x30000, scoped, tag = 'input window, operand 4, single buffered']
    %11 = vsyncpa [#allocation3], 0
    %12 = vsyncpa [#allocation5], 0
    // Predicated region
    $region2: #{_forward_fused.1} parent=1 // pred_check
      _
    $region3: #{_forward_fused.1} parent=1 // pred_check_branch
      %14 = sbr.rel (0) target = $region5
    $region4: #{_forward_fused.1} parent=1 // pred_region
      _
    $region5: #{_forward_fused.1} parent=1 // pred_fallthru
      _
    // Predicated region
    $region6: #{_forward_fused.1} parent=1 // pred_check
      _
    $region7: #{_forward_fused.1} parent=1 // pred_check_branch
      %16 = sbr.rel (0) target = $region9
    $region8: #{_forward_fused.1} parent=1 // pred_region
      %18 = vsyncadd [#allocation3], 0
      %s19 = sshll.u32 %s1, 4
      %s20 = int_to_ptr.hbm [resolvable:$true] %s19
      %s21 = sshll.u32 [#allocation2], 4
      %s22 = int_to_ptr.vmem [resolvable:$true] %s21
      %27 = dma.hbm_to_vmem [thread:$0]  %s20, 2048, %s22, [#allocation3], 128, 128, 8
    $region9: #{_forward_fused.1} parent=1 // pred_fallthru
      _
    // Predicated region
    $region10: #{_forward_fused.1} parent=1 // pred_check
      _
    $region11: #{_forward_fused.1} parent=1 // pred_check_branch
      %29 = sbr.rel (0) target = $region13
    $region12: #{_forward_fused.1} parent=1 // pred_region
      %31 = vsyncadd [#allocation5], 0
      %s32 = sshll.u32 %s2, 4
      %s33 = int_to_ptr.hbm [resolvable:$true] %s32
      %s34 = sshll.u32 [#allocation4], 4
      %s35 = int_to_ptr.vmem [resolvable:$true] %s34
      %40 = dma.hbm_to_vmem [thread:$0]  %s33, 6144, %s35, [#allocation5], 384, 384, 24
    $region13: #{_forward_fused.1} parent=1 // pred_fallthru
      _
    // Predicated region
    $region14: #{_forward_fused.1} parent=1 // pred_check
      _
    $region15: #{_forward_fused.1} parent=1 // pred_check_branch
      %42 = sbr.rel (0) target = $region17
    $region16: #{_forward_fused.1} parent=1 // pred_region
      _
    $region17: #{_forward_fused.1} parent=1 // pred_fallthru
      _
    // Predicated region
    $region18: #{_forward_fused.1} parent=1 // pred_check
      _
    $region19: #{_forward_fused.1} parent=1 // pred_check_branch
      %44 = sbr.rel (0) target = $region21
    $region20: #{_forward_fused.1} parent=1 // pred_region
      %46 = vsyncadd [#allocation5], 0
      %s47 = sshll.u32 %s4, 4
      %s48 = int_to_ptr.hbm [resolvable:$true] %s47
      %s49 = sshll.u32 [#allocation6], 4
      %s50 = int_to_ptr.vmem [resolvable:$true] %s49
      %55 = dma.hbm_to_vmem [thread:$0]  %s48, 6144, %s50, [#allocation5], 128, 128, 8
    $region21: #{_forward_fused.1} parent=1 // pred_fallthru
      _
    // Predicated region
    $region22: #{_forward_fused.1} parent=1 // pred_check
      _
    $region23: #{_forward_fused.1} parent=1 // pred_check_branch
      %57 = sbr.rel (0) target = $region25
    $region24: #{_forward_fused.1} parent=1 // pred_region
      _
    $region25: #{_forward_fused.1} parent=1 // pred_fallthru
      _
    // Predicated region
    $region26: #{_forward_fused.1} parent=1 // pred_check
      _
    $region27: #{_forward_fused.1} parent=1 // pred_check_branch
      %59 = sbr.rel (0) target = $region29
    $region28: #{_forward_fused.1} parent=1 // pred_region
      %61 = dma.done [#allocation3], 2048
    $region29: #{_forward_fused.1} parent=1 // pred_fallthru
      _
    // Predicated region
    $region30: #{_forward_fused.1} parent=1 // pred_check
      _
    $region31: #{_forward_fused.1} parent=1 // pred_check_branch
      %63 = sbr.rel (0) target = $region33
    $region32: #{_forward_fused.1} parent=1 // pred_region
      %65 = dma.done [#allocation5], 6144
    $region33: #{_forward_fused.1} parent=1 // pred_fallthru
      _
    // Predicated region
    $region34: #{_forward_fused.1} parent=1 // pred_check
      _
    $region35: #{_forward_fused.1} parent=1 // pred_check_branch
      %67 = sbr.rel (0) target = $region37
    $region36: #{_forward_fused.1} parent=1 // pred_region
      %69 = dma.done [#allocation5], 6144
    $region37: #{_forward_fused.1} parent=1 // pred_fallthru
      _
    %v70 = vld [vmem:[#allocation2] sm:$0xff]
    %v71 = vld [vmem:[#allocation2 + $0x8] sm:$0xff]
    %v72 = vld [vmem:[#allocation2 + $0x10] sm:$0xff]
    %v73 = vld [vmem:[#allocation2 + $0x18] sm:$0xff]
    %v74 = vld [vmem:[#allocation2 + $0x20] sm:$0xff]
    %v75 = vld [vmem:[#allocation2 + $0x28] sm:$0xff]
    %v76 = vld [vmem:[#allocation2 + $0x30] sm:$0xff]
    %v77 = vld [vmem:[#allocation2 + $0x38] sm:$0xff]
    %v78 = vld [vmem:[#allocation2 + $0x40] sm:$0xff]
    %v79 = vld [vmem:[#allocation2 + $0x48] sm:$0xff]
    %v80 = vld [vmem:[#allocation2 + $0x50] sm:$0xff]
    %v81 = vld [vmem:[#allocation2 + $0x58] sm:$0xff]
    %v82 = vld [vmem:[#allocation2 + $0x60] sm:$0xff]
    %v83 = vld [vmem:[#allocation2 + $0x68] sm:$0xff]
    %v84 = vld [vmem:[#allocation2 + $0x70] sm:$0xff]
    %v85 = vld [vmem:[#allocation2 + $0x78] sm:$0xff]
    %v86 = vld [vmem:[%s0] sm:$0xff]
    %v87 = vlaneseq
    %v88 = vand.u32 %v87, 127
    %89 = vset.pattern.permute.xlu0 0
    %90 = vperm.xlu0 %89, %v86
    %v91 = vpop.permute.xlu0 %90
    %vm92 = vcmp.eq.s32.totalorder %v91, %v88
    %v93 = vsel %vm92, 1, 0
    %v94 = vcvt.s32.f32 %v93
    %95 = vmatpush.msra.mxu0 %v85
    %96 = vmatpush.msra.mxu0 %v84
    %97 = vmatpush.msra.mxu0 %v83
    %98 = vmatpush.msra.mxu0 %v82
    %99 = vmatpush.msra.mxu0 %v81
    %100 = vmatpush.msra.mxu0 %v80
    %101 = vmatpush.msra.mxu0 %v79
    %102 = vmatpush.msra.mxu0 %v78
    %103 = vmatpush.msra.mxu0 %v77
    %104 = vmatpush.msra.mxu0 %v76
    %105 = vmatpush.msra.mxu0 %v75
    %106 = vmatpush.msra.mxu0 %v74
    %107 = vmatpush.msra.mxu0 %v73
    %108 = vmatpush.msra.mxu0 %v72
    %109 = vmatpush.msra.mxu0 %v71
    %110 = vmatpush.msra.mxu0 %v70
    %111 = vmatmul.f32.gmra.mxu0 %v94
    %v112 = vpop.f32.mrf.mxu0
    %v113 = vadd.f32 0.0, %v112
    %114 = vdwg.mxu0
    %115 = vset.pattern.permute.xlu0 1
    %116 = vperm.xlu0 %115, %v86
    %v117 = vpop.permute.xlu0 %116
    %vm118 = vcmp.eq.s32.totalorder %v117, %v88
    %v119 = vsel %vm118, 1, 0
    %v120 = vcvt.s32.f32 %v119
    %121 = vmatpush.msra.mxu0 %v85
    %122 = vmatpush.msra.mxu0 %v84
    %123 = vmatpush.msra.mxu0 %v83
    %124 = vmatpush.msra.mxu0 %v82
    %125 = vmatpush.msra.mxu0 %v81
    %126 = vmatpush.msra.mxu0 %v80
    %127 = vmatpush.msra.mxu0 %v79
    %128 = vmatpush.msra.mxu0 %v78
    %129 = vmatpush.msra.mxu0 %v77
    %130 = vmatpush.msra.mxu0 %v76
    %131 = vmatpush.msra.mxu0 %v75
    %132 = vmatpush.msra.mxu0 %v74
    %133 = vmatpush.msra.mxu0 %v73
    %134 = vmatpush.msra.mxu0 %v72
    %135 = vmatpush.msra.mxu0 %v71
    %136 = vmatpush.msra.mxu0 %v70
    %137 = vmatmul.f32.gmra.mxu0 %v120
    %v138 = vpop.f32.mrf.mxu0
    %v139 = vadd.f32 0.0, %v138
    %140 = vdwg.mxu0
    %v141 = vmax.f32 %v113, %v139
    %142 = vset.pattern.permute.xlu0 2
    %143 = vperm.xlu0 %142, %v86
    %v144 = vpop.permute.xlu0 %143
    %vm145 = vcmp.eq.s32.totalorder %v144, %v88
    %v146 = vsel %vm145, 1, 0
    %v147 = vcvt.s32.f32 %v146
    %148 = vmatpush.msra.mxu0 %v85
    %149 = vmatpush.msra.mxu0 %v84
    %150 = vmatpush.msra.mxu0 %v83
    %151 = vmatpush.msra.mxu0 %v82
    %152 = vmatpush.msra.mxu0 %v81
    %153 = vmatpush.msra.mxu0 %v80
    %154 = vmatpush.msra.mxu0 %v79
    %155 = vmatpush.msra.mxu0 %v78
    %156 = vmatpush.msra.mxu0 %v77
    %157 = vmatpush.msra.mxu0 %v76
    %158 = vmatpush.msra.mxu0 %v75
    %159 = vmatpush.msra.mxu0 %v74
    %160 = vmatpush.msra.mxu0 %v73
    %161 = vmatpush.msra.mxu0 %v72
    %162 = vmatpush.msra.mxu0 %v71
    %163 = vmatpush.msra.mxu0 %v70
    %164 = vmatmul.f32.gmra.mxu0 %v147
    %v165 = vpop.f32.mrf.mxu0
    %v166 = vadd.f32 0.0, %v165
    %167 = vdwg.mxu0
    %v168 = vmax.f32 %v141, %v166
    %169 = vset.pattern.permute.xlu0 3
    %170 = vperm.xlu0 %169, %v86
    %v171 = vpop.permute.xlu0 %170
    %vm172 = vcmp.eq.s32.totalorder %v171, %v88
    %v173 = vsel %vm172, 1, 0
    %v174 = vcvt.s32.f32 %v173
    %175 = vmatpush.msra.mxu0 %v85
    %176 = vmatpush.msra.mxu0 %v84
    %177 = vmatpush.msra.mxu0 %v83
    %178 = vmatpush.msra.mxu0 %v82
    %179 = vmatpush.msra.mxu0 %v81
    %180 = vmatpush.msra.mxu0 %v80
    %181 = vmatpush.msra.mxu0 %v79
    %182 = vmatpush.msra.mxu0 %v78
    %183 = vmatpush.msra.mxu0 %v77
    %184 = vmatpush.msra.mxu0 %v76
    %185 = vmatpush.msra.mxu0 %v75
    %186 = vmatpush.msra.mxu0 %v74
    %187 = vmatpush.msra.mxu0 %v73
    %188 = vmatpush.msra.mxu0 %v72
    %189 = vmatpush.msra.mxu0 %v71
    %190 = vmatpush.msra.mxu0 %v70
    %191 = vmatmul.f32.gmra.mxu0 %v174
    %v192 = vpop.f32.mrf.mxu0
    %v193 = vadd.f32 0.0, %v192
    %194 = vdwg.mxu0
    %v195 = vmax.f32 %v168, %v193
    %196 = vset.pattern.permute.xlu0 4
    %197 = vperm.xlu0 %196, %v86
    %v198 = vpop.permute.xlu0 %197
    %vm199 = vcmp.eq.s32.totalorder %v198, %v88
    %v200 = vsel %vm199, 1, 0
    %v201 = vcvt.s32.f32 %v200
    %202 = vmatpush.msra.mxu0 %v85
    %203 = vmatpush.msra.mxu0 %v84
    %204 = vmatpush.msra.mxu0 %v83
    %205 = vmatpush.msra.mxu0 %v82
    %206 = vmatpush.msra.mxu0 %v81
    %207 = vmatpush.msra.mxu0 %v80
    %208 = vmatpush.msra.mxu0 %v79
    %209 = vmatpush.msra.mxu0 %v78
    %210 = vmatpush.msra.mxu0 %v77
    %211 = vmatpush.msra.mxu0 %v76
    %212 = vmatpush.msra.mxu0 %v75
    %213 = vmatpush.msra.mxu0 %v74
    %214 = vmatpush.msra.mxu0 %v73
    %215 = vmatpush.msra.mxu0 %v72
    %216 = vmatpush.msra.mxu0 %v71
    %217 = vmatpush.msra.mxu0 %v70
    %218 = vmatmul.f32.gmra.mxu0 %v201
    %v219 = vpop.f32.mrf.mxu0
    %v220 = vadd.f32 0.0, %v219
    %221 = vdwg.mxu0
    %v222 = vmax.f32 %v195, %v220
    %223 = vset.pattern.permute.xlu0 5
    %224 = vperm.xlu0 %223, %v86
    %v225 = vpop.permute.xlu0 %224
    %vm226 = vcmp.eq.s32.totalorder %v225, %v88
    %v227 = vsel %vm226, 1, 0
    %v228 = vcvt.s32.f32 %v227
    %229 = vmatpush.msra.mxu0 %v85
    %230 = vmatpush.msra.mxu0 %v84
    %231 = vmatpush.msra.mxu0 %v83
    %232 = vmatpush.msra.mxu0 %v82
    %233 = vmatpush.msra.mxu0 %v81
    %234 = vmatpush.msra.mxu0 %v80
    %235 = vmatpush.msra.mxu0 %v79
    %236 = vmatpush.msra.mxu0 %v78
    %237 = vmatpush.msra.mxu0 %v77
    %238 = vmatpush.msra.mxu0 %v76
    %239 = vmatpush.msra.mxu0 %v75
    %240 = vmatpush.msra.mxu0 %v74
    %241 = vmatpush.msra.mxu0 %v73
    %242 = vmatpush.msra.mxu0 %v72
    %243 = vmatpush.msra.mxu0 %v71
    %244 = vmatpush.msra.mxu0 %v70
    %245 = vmatmul.f32.gmra.mxu0 %v228
    %v246 = vpop.f32.mrf.mxu0
    %v247 = vadd.f32 0.0, %v246
    %248 = vdwg.mxu0
    %v249 = vmax.f32 %v222, %v247
    %250 = vset.pattern.permute.xlu0 6
    %251 = vperm.xlu0 %250, %v86
    %v252 = vpop.permute.xlu0 %251
    %vm253 = vcmp.eq.s32.totalorder %v252, %v88
    %v254 = vsel %vm253, 1, 0
    %v255 = vcvt.s32.f32 %v254
    %256 = vmatpush.msra.mxu0 %v85
    %257 = vmatpush.msra.mxu0 %v84
    %258 = vmatpush.msra.mxu0 %v83
    %259 = vmatpush.msra.mxu0 %v82
    %260 = vmatpush.msra.mxu0 %v81
    %261 = vmatpush.msra.mxu0 %v80
    %262 = vmatpush.msra.mxu0 %v79
    %263 = vmatpush.msra.mxu0 %v78
    %264 = vmatpush.msra.mxu0 %v77
    %265 = vmatpush.msra.mxu0 %v76
    %266 = vmatpush.msra.mxu0 %v75
    %267 = vmatpush.msra.mxu0 %v74
    %268 = vmatpush.msra.mxu0 %v73
    %269 = vmatpush.msra.mxu0 %v72
    %270 = vmatpush.msra.mxu0 %v71
    %271 = vmatpush.msra.mxu0 %v70
    %272 = vmatmul.f32.gmra.mxu0 %v255
    %v273 = vpop.f32.mrf.mxu0
    %v274 = vadd.f32 0.0, %v273
    %275 = vdwg.mxu0
    %v276 = vmax.f32 %v249, %v274
    %277 = vset.pattern.permute.xlu0 7
    %278 = vperm.xlu0 %277, %v86
    %v279 = vpop.permute.xlu0 %278
    %vm280 = vcmp.eq.s32.totalorder %v279, %v88
    %v281 = vsel %vm280, 1, 0
    %v282 = vcvt.s32.f32 %v281
    %283 = vmatpush.msra.mxu0 %v85
    %284 = vmatpush.msra.mxu0 %v84
    %285 = vmatpush.msra.mxu0 %v83
    %286 = vmatpush.msra.mxu0 %v82
    %287 = vmatpush.msra.mxu0 %v81
    %288 = vmatpush.msra.mxu0 %v80
    %289 = vmatpush.msra.mxu0 %v79
    %290 = vmatpush.msra.mxu0 %v78
    %291 = vmatpush.msra.mxu0 %v77
    %292 = vmatpush.msra.mxu0 %v76
    %293 = vmatpush.msra.mxu0 %v75
    %294 = vmatpush.msra.mxu0 %v74
    %295 = vmatpush.msra.mxu0 %v73
    %296 = vmatpush.msra.mxu0 %v72
    %297 = vmatpush.msra.mxu0 %v71
    %298 = vmatpush.msra.mxu0 %v70
    %299 = vmatmul.f32.gmra.mxu0 %v282
    %v300 = vpop.f32.mrf.mxu0
    %v301 = vadd.f32 0.0, %v300
    %302 = vdwg.mxu0
    %v303 = vmax.f32 %v276, %v301
    %v304 = vld [vmem:[#allocation4] sm:$0xff]
    %v305 = vld [vmem:[#allocation4 + $0x8] sm:$0xff]
    %v306 = vld [vmem:[#allocation4 + $0x10] sm:$0xff]
    %v307 = vld [vmem:[#allocation4 + $0x18] sm:$0xff]
    %v308 = vld [vmem:[#allocation4 + $0x20] sm:$0xff]
    %v309 = vld [vmem:[#allocation4 + $0x28] sm:$0xff]
    %v310 = vld [vmem:[#allocation4 + $0x30] sm:$0xff]
    %v311 = vld [vmem:[#allocation4 + $0x38] sm:$0xff]
    %v312 = vld [vmem:[#allocation4 + $0x40] sm:$0xff]
    %v313 = vld [vmem:[#allocation4 + $0x48] sm:$0xff]
    %v314 = vld [vmem:[#allocation4 + $0x50] sm:$0xff]
    %v315 = vld [vmem:[#allocation4 + $0x58] sm:$0xff]
    %v316 = vld [vmem:[#allocation4 + $0x60] sm:$0xff]
    %v317 = vld [vmem:[#allocation4 + $0x68] sm:$0xff]
    %v318 = vld [vmem:[#allocation4 + $0x70] sm:$0xff]
    %v319 = vld [vmem:[#allocation4 + $0x78] sm:$0xff]
    %v320 = vld [vmem:[#allocation4 + $0x80] sm:$0xff]
    %v321 = vld [vmem:[#allocation4 + $0x88] sm:$0xff]
    %v322 = vld [vmem:[#allocation4 + $0x90] sm:$0xff]
    %v323 = vld [vmem:[#allocation4 + $0x98] sm:$0xff]
    %v324 = vld [vmem:[#allocation4 + $0xa0] sm:$0xff]
    %v325 = vld [vmem:[#allocation4 + $0xa8] sm:$0xff]
    %v326 = vld [vmem:[#allocation4 + $0xb0] sm:$0xff]
    %v327 = vld [vmem:[#allocation4 + $0xb8] sm:$0xff]
    %v328 = vld [vmem:[#allocation4 + $0xc0] sm:$0xff]
    %v329 = vld [vmem:[#allocation4 + $0xc8] sm:$0xff]
    %v330 = vld [vmem:[#allocation4 + $0xd0] sm:$0xff]
    %v331 = vld [vmem:[#allocation4 + $0xd8] sm:$0xff]
    %v332 = vld [vmem:[#allocation4 + $0xe0] sm:$0xff]
    %v333 = vld [vmem:[#allocation4 + $0xe8] sm:$0xff]
    %v334 = vld [vmem:[#allocation4 + $0xf0] sm:$0xff]
    %v335 = vld [vmem:[#allocation4 + $0xf8] sm:$0xff]
    %v336 = vld [vmem:[#allocation4 + $0x100] sm:$0xff]
    %v337 = vld [vmem:[#allocation4 + $0x108] sm:$0xff]
    %v338 = vld [vmem:[#allocation4 + $0x110] sm:$0xff]
    %v339 = vld [vmem:[#allocation4 + $0x118] sm:$0xff]
    %v340 = vld [vmem:[#allocation4 + $0x120] sm:$0xff]
    %v341 = vld [vmem:[#allocation4 + $0x128] sm:$0xff]
    %v342 = vld [vmem:[#allocation4 + $0x130] sm:$0xff]
    %v343 = vld [vmem:[#allocation4 + $0x138] sm:$0xff]
    %v344 = vld [vmem:[#allocation4 + $0x140] sm:$0xff]
    %v345 = vld [vmem:[#allocation4 + $0x148] sm:$0xff]
    %v346 = vld [vmem:[#allocation4 + $0x150] sm:$0xff]
    %v347 = vld [vmem:[#allocation4 + $0x158] sm:$0xff]
    %v348 = vld [vmem:[#allocation4 + $0x160] sm:$0xff]
    %v349 = vld [vmem:[#allocation4 + $0x168] sm:$0xff]
    %v350 = vld [vmem:[#allocation4 + $0x170] sm:$0xff]
    %v351 = vld [vmem:[#allocation4 + $0x178] sm:$0xff]
    %v352 = vld [vmem:[%s3] sm:$0x7]
    %v354 = vperm.slane %v352, 0
    %v355 = vperm.slane %v352, 1
    %v356 = vperm.slane %v352, 2
    %360 = vmatpush.msra.mxu0 %v349
    %361 = vmatpush.msra.mxu0 %v346
    %362 = vmatpush.msra.mxu0 %v343
    %363 = vmatpush.msra.mxu0 %v340
    %364 = vmatpush.msra.mxu0 %v337
    %365 = vmatpush.msra.mxu0 %v334
    %366 = vmatpush.msra.mxu0 %v331
    %367 = vmatpush.msra.mxu0 %v328
    %368 = vmatpush.msra.mxu0 %v325
    %369 = vmatpush.msra.mxu0 %v322
    %370 = vmatpush.msra.mxu0 %v319
    %371 = vmatpush.msra.mxu0 %v316
    %372 = vmatpush.msra.mxu0 %v313
    %373 = vmatpush.msra.mxu0 %v310
    %374 = vmatpush.msra.mxu0 %v307
    %375 = vmatpush.msra.mxu0 %v304
    %376 = vmatmul.f32.gmra.mxu0 %v303
    %v377 = vpop.f32.mrf.mxu0
    %v378 = vadd.f32 %v354, %v377
    %379 = vdwg.mxu0
    %380 = vmatpush.msra.mxu0 %v350
    %381 = vmatpush.msra.mxu0 %v347
    %382 = vmatpush.msra.mxu0 %v344
    %383 = vmatpush.msra.mxu0 %v341
    %384 = vmatpush.msra.mxu0 %v338
    %385 = vmatpush.msra.mxu0 %v335
    %386 = vmatpush.msra.mxu0 %v332
    %387 = vmatpush.msra.mxu0 %v329
    %388 = vmatpush.msra.mxu0 %v326
    %389 = vmatpush.msra.mxu0 %v323
    %390 = vmatpush.msra.mxu0 %v320
    %391 = vmatpush.msra.mxu0 %v317
    %392 = vmatpush.msra.mxu0 %v314
    %393 = vmatpush.msra.mxu0 %v311
    %394 = vmatpush.msra.mxu0 %v308
    %395 = vmatpush.msra.mxu0 %v305
    %396 = vmatmul.f32.gmra.mxu0 %v303
    %v397 = vpop.f32.mrf.mxu0
    %v398 = vadd.f32 %v355, %v397
    %399 = vdwg.mxu0
    %400 = vmatpush.msra.mxu0 %v351
    %401 = vmatpush.msra.mxu0 %v348
    %402 = vmatpush.msra.mxu0 %v345
    %403 = vmatpush.msra.mxu0 %v342
    %404 = vmatpush.msra.mxu0 %v339
    %405 = vmatpush.msra.mxu0 %v336
    %406 = vmatpush.msra.mxu0 %v333
    %407 = vmatpush.msra.mxu0 %v330
    %408 = vmatpush.msra.mxu0 %v327
    %409 = vmatpush.msra.mxu0 %v324
    %410 = vmatpush.msra.mxu0 %v321
    %411 = vmatpush.msra.mxu0 %v318
    %412 = vmatpush.msra.mxu0 %v315
    %413 = vmatpush.msra.mxu0 %v312
    %414 = vmatpush.msra.mxu0 %v309
    %415 = vmatpush.msra.mxu0 %v306
    %416 = vmatmul.f32.gmra.mxu0 %v303
    %v417 = vpop.f32.mrf.mxu0
    %v418 = vadd.f32 %v356, %v417
    %419 = vdwg.mxu0
    %v420 = vmax.f32 %v378, 0.0
    %v421 = vmax.f32 %v398, 0.0
    %v422 = vmax.f32 %v418, 0.0
    %v423 = vld [vmem:[#allocation6] sm:$0xff]
    %v424 = vld [vmem:[#allocation6 + $0x8] sm:$0xff]
    %v425 = vld [vmem:[#allocation6 + $0x10] sm:$0xff]
    %v426 = vld [vmem:[#allocation6 + $0x18] sm:$0xff]
    %v427 = vld [vmem:[#allocation6 + $0x20] sm:$0xff]
    %v428 = vld [vmem:[#allocation6 + $0x28] sm:$0xff]
    %v429 = vld [vmem:[#allocation6 + $0x30] sm:$0xff]
    %v430 = vld [vmem:[#allocation6 + $0x38] sm:$0xff]
    %v431 = vld [vmem:[#allocation6 + $0x40] sm:$0xff]
    %v432 = vld [vmem:[#allocation6 + $0x48] sm:$0xff]
    %v433 = vld [vmem:[#allocation6 + $0x50] sm:$0xff]
    %v434 = vld [vmem:[#allocation6 + $0x58] sm:$0xff]
    %v435 = vld [vmem:[#allocation6 + $0x60] sm:$0xff]
    %v436 = vld [vmem:[#allocation6 + $0x68] sm:$0xff]
    %v437 = vld [vmem:[#allocation6 + $0x70] sm:$0xff]
    %v438 = vld [vmem:[#allocation6 + $0x78] sm:$0xff]
    %v439 = vld [vmem:[#allocation6 + $0x80] sm:$0xff]
    %v440 = vld [vmem:[#allocation6 + $0x88] sm:$0xff]
    %v441 = vld [vmem:[#allocation6 + $0x90] sm:$0xff]
    %v442 = vld [vmem:[#allocation6 + $0x98] sm:$0xff]
    %v443 = vld [vmem:[#allocation6 + $0xa0] sm:$0xff]
    %v444 = vld [vmem:[#allocation6 + $0xa8] sm:$0xff]
    %v445 = vld [vmem:[#allocation6 + $0xb0] sm:$0xff]
    %v446 = vld [vmem:[#allocation6 + $0xb8] sm:$0xff]
    %v447 = vld [vmem:[#allocation6 + $0xc0] sm:$0xff]
    %v448 = vld [vmem:[#allocation6 + $0xc8] sm:$0xff]
    %v449 = vld [vmem:[#allocation6 + $0xd0] sm:$0xff]
    %v450 = vld [vmem:[#allocation6 + $0xd8] sm:$0xff]
    %v451 = vld [vmem:[#allocation6 + $0xe0] sm:$0xff]
    %v452 = vld [vmem:[#allocation6 + $0xe8] sm:$0xff]
    %v453 = vld [vmem:[#allocation6 + $0xf0] sm:$0xff]
    %v454 = vld [vmem:[#allocation6 + $0xf8] sm:$0xff]
    %v455 = vld [vmem:[#allocation6 + $0x100] sm:$0xff]
    %v456 = vld [vmem:[#allocation6 + $0x108] sm:$0xff]
    %v457 = vld [vmem:[#allocation6 + $0x110] sm:$0xff]
    %v458 = vld [vmem:[#allocation6 + $0x118] sm:$0xff]
    %v459 = vld [vmem:[#allocation6 + $0x120] sm:$0xff]
    %v460 = vld [vmem:[#allocation6 + $0x128] sm:$0xff]
    %v461 = vld [vmem:[#allocation6 + $0x130] sm:$0xff]
    %v462 = vld [vmem:[#allocation6 + $0x138] sm:$0xff]
    %v463 = vld [vmem:[#allocation6 + $0x140] sm:$0xff]
    %v464 = vld [vmem:[#allocation6 + $0x148] sm:$0xff]
    %v465 = vld [vmem:[#allocation6 + $0x150] sm:$0xff]
    %v466 = vld [vmem:[#allocation6 + $0x158] sm:$0xff]
    %v467 = vld [vmem:[#allocation6 + $0x160] sm:$0xff]
    %v468 = vld [vmem:[#allocation6 + $0x168] sm:$0xff]
    %v469 = vld [vmem:[#allocation6 + $0x170] sm:$0xff]
    %v470 = vld [vmem:[#allocation6 + $0x178] sm:$0xff]
    %v471 = vld [vmem:[%s5] sm:$0x1]
    %v473 = vperm.slane %v471, 0
    %475 = vmatpush.msra.mxu0 %v438
    %476 = vmatpush.msra.mxu0 %v437
    %477 = vmatpush.msra.mxu0 %v436
    %478 = vmatpush.msra.mxu0 %v435
    %479 = vmatpush.msra.mxu0 %v434
    %480 = vmatpush.msra.mxu0 %v433
    %481 = vmatpush.msra.mxu0 %v432
    %482 = vmatpush.msra.mxu0 %v431
    %483 = vmatpush.msra.mxu0 %v430
    %484 = vmatpush.msra.mxu0 %v429
    %485 = vmatpush.msra.mxu0 %v428
    %486 = vmatpush.msra.mxu0 %v427
    %487 = vmatpush.msra.mxu0 %v426
    %488 = vmatpush.msra.mxu0 %v425
    %489 = vmatpush.msra.mxu0 %v424
    %490 = vmatpush.msra.mxu0 %v423
    %491 = vmatmul.f32.gmra.mxu0 %v420
    %v492 = vpop.f32.mrf.mxu0
    %v493 = vadd.f32 %v473, %v492
    %494 = vdwg.mxu0
    %495 = vmatpush.msra.mxu0 %v454
    %496 = vmatpush.msra.mxu0 %v453
    %497 = vmatpush.msra.mxu0 %v452
    %498 = vmatpush.msra.mxu0 %v451
    %499 = vmatpush.msra.mxu0 %v450
    %500 = vmatpush.msra.mxu0 %v449
    %501 = vmatpush.msra.mxu0 %v448
    %502 = vmatpush.msra.mxu0 %v447
    %503 = vmatpush.msra.mxu0 %v446
    %504 = vmatpush.msra.mxu0 %v445
    %505 = vmatpush.msra.mxu0 %v444
    %506 = vmatpush.msra.mxu0 %v443
    %507 = vmatpush.msra.mxu0 %v442
    %508 = vmatpush.msra.mxu0 %v441
    %509 = vmatpush.msra.mxu0 %v440
    %510 = vmatpush.msra.mxu0 %v439
    %511 = vmatmul.f32.gmra.mxu0 %v421
    %v512 = vpop.f32.mrf.mxu0
    %v513 = vadd.f32 %v493, %v512
    %514 = vdwg.mxu0
    %515 = vmatpush.msra.mxu0 %v470
    %516 = vmatpush.msra.mxu0 %v469
    %517 = vmatpush.msra.mxu0 %v468
    %518 = vmatpush.msra.mxu0 %v467
    %519 = vmatpush.msra.mxu0 %v466
    %520 = vmatpush.msra.mxu0 %v465
    %521 = vmatpush.msra.mxu0 %v464
    %522 = vmatpush.msra.mxu0 %v463
    %523 = vmatpush.msra.mxu0 %v462
    %524 = vmatpush.msra.mxu0 %v461
    %525 = vmatpush.msra.mxu0 %v460
    %526 = vmatpush.msra.mxu0 %v459
    %527 = vmatpush.msra.mxu0 %v458
    %528 = vmatpush.msra.mxu0 %v457
    %529 = vmatpush.msra.mxu0 %v456
    %530 = vmatpush.msra.mxu0 %v455
    %531 = vmatmul.f32.gmra.mxu0 %v422
    %v532 = vpop.f32.mrf.mxu0
    %v533 = vadd.f32 %v513, %v532
    %534 = vdwg.mxu0
    %535 = vst [vmem:[%s6] sm:$0xff] %v533
    // Predicated region
    $region38: #{_forward_fused.1} parent=1 // pred_check
      _
    $region39: #{_forward_fused.1} parent=1 // pred_check_branch
      %537 = sbr.rel (0) target = $region41
    $region40: #{_forward_fused.1} parent=1 // pred_region
      _
    $region41: #{_forward_fused.1} parent=1 // pred_fallthru
      _
    // Predicated region
    $region42: #{_forward_fused.1} parent=1 // pred_check
      _
    $region43: #{_forward_fused.1} parent=1 // pred_check_branch
      %539 = sbr.rel (0) target = $region45
    $region44: #{_forward_fused.1} parent=1 // pred_region
      _
    $region45: #{_forward_fused.1} parent=1 // pred_fallthru
      _
    %540 = vsyncpa [#allocation3], 1
    %541 = vsyncpa [#allocation5], 1

</llo_original>
